<compile_context>
chip_gen: v7x
topology: tpu7x:2x2x1
jax: 0.10.0
libtpu: 0.0.40
codegen_flags: <defaults>
</compile_context>

<pallas_src>
import math

import jax
import jax.numpy as jnp
from jax import lax
from jax.experimental import pallas as pl
from jax.experimental.pallas import tpu as pltpu


def _plif_kernel(vth: float, out_dtype, unroll: int):
    def kernel(tau_ref, x_ref, spike_ref, mem_ref):
        # tau_ref  : SMEM (1, 1) float32            -- sigmoid(w)
        # x_ref    : VMEM (1, t_chunk, r_tile, L) float32
        # spike_ref: VMEM (1, t_chunk, r_tile, L) out_dtype
        # mem_ref  : VMEM (r_tile, L) float32 scratch -- membrane carried across
        #            T-chunks for the current (batch, row-tile) block.
        #
        # Correctness invariant: the T axis MUST stay the last ("arbitrary")
        # grid axis so program_id(2) == 0 re-zeros mem exactly when (b, r)
        # changes.  Do not reorder the grid.
        @pl.when(pl.program_id(2) == 0)
        def _():
            mem_ref[...] = jnp.zeros_like(mem_ref)

        tau = tau_ref[0, 0]
        t_chunk = x_ref.shape[1]

        def body(t, mem):
            mem = tau * mem + x_ref[0, t]                 # dense (r_tile, L) tile
            fire = mem > vth                              # strict '>' like x.gt(0)
            spike_ref[0, t] = fire.astype(out_dtype)
            return jnp.where(fire, 0.0, mem)              # hard reset

        eff_unroll = max(1, min(t_chunk, unroll))
        mem_ref[...] = lax.fori_loop(0, t_chunk, body, mem_ref[...],
                                     unroll=eff_unroll)   # carry to next T-chunk

    return kernel


def _tpu_config():
    """Generation-aware (num_tensorcores, block_budget_bytes, vmem_limit_bytes)."""
    vmem_bytes = None
    try:
        info = pltpu.get_tpu_info()
        vmem_bytes = int(info.vmem_capacity_bytes)
    except Exception:
        pass
    kind = ""
    try:
        kind = (jax.devices()[0].device_kind or "").lower()
    except Exception:
        pass
    if vmem_bytes is None:
        # v7x has 64 MiB VMEM per TC; v5e/v6e have 128 MiB.
        vmem_bytes = 64 * 1024 * 1024 if "v7" in kind else 128 * 1024 * 1024
    # v7x: 2 TensorCores per chip; v5e/v6e: 1.
    num_tc = 2 if ("v7" in kind or vmem_bytes <= 64 * 1024 * 1024) else 1
    # Leave headroom for compiler-internal scratch; never ask for more than
    # 64 MiB even on 128 MiB parts (no benefit for a mem-bound kernel).
    vmem_limit = min((vmem_bytes * 3) // 4, 64 * 1024 * 1024)
    block_budget = (vmem_limit * 3) // 4
    return num_tc, block_budget, vmem_limit


def _pick_tiling(B, T, M, *, out_itemsize, num_tensorcores, block_budget_bytes,
                 max_lanes=2048):
    """Choose (R, L, r_tile, t_chunk, unroll).  M must be a multiple of 128."""
    assert M % 128 == 0
    # Lane split: L a multiple of 128 dividing M, preferring R = M/L >= 8 so
    # per-timestep tiles use full sublanes.
    lane_cands = [l for l in range(128, min(max_lanes, M) + 1, 128) if M % l == 0]
    preferred = [l for l in lane_cands if M // l >= 8]
    L = (preferred or lane_cands)[-1]
    R = M // L

    # Sublane alignment of the (packed) output block: f32 -> 8, bf16 -> 16,
    # int8 -> 32 (keeps the spike store sublane-dense / unmasked).
    sub = 8 * max(1, 4 // out_itemsize)

    # Row-tile candidates: full R (one contiguous HBM run per timestep --
    # preferred on single-TC v5e/v6e) plus aligned divisors for when v7x needs
    # more parallel blocks or VMEM forces a split.
    cands = sorted({R} | {r for r in range(sub, R, sub) if R % r == 0},
                   reverse=True)

    per_elem = 2 * 4 + 2 * out_itemsize            # x + spike, double-buffered

    def block_bytes(r, t):
        return per_elem * t * r * L + 4 * r * L    # + membrane carry scratch

    # Never pick a tile whose minimal (t_chunk=1) block overflows the budget.
    fitting = [r for r in cands if block_bytes(r, 1) <= block_budget_bytes]
    if not fitting:
        fitting = [cands[-1]]

    # Keep >= num_tensorcores "parallel" blocks (v7x megacore).  B is already a
    # parallel grid axis, so R is only split when B alone is too small.
    parallel_ok = [r for r in fitting if B * (R // r) >= num_tensorcores]
    r_tile = max(parallel_ok) if parallel_ok else min(fitting)

    # Time chunk: largest divisor of T whose block still fits the budget
    # (fewer grid steps -> less fixed ~0.35 us/step overhead).
    t_divs = [t for t in range(1, T + 1) if T % t == 0]
    fits_t = [t for t in t_divs if block_bytes(r_tile, t) <= block_budget_bytes]
    t_chunk = max(fits_t) if fits_t else 1

    # Unroll only small per-step tiles; large tiles already expose plenty of
    # independent vreg work per step.
    per_step_bytes = r_tile * L * 4
    unroll = 8 if per_step_bytes < 64 * 1024 else 2
    return R, L, r_tile, t_chunk, unroll


def plif_forward(x: jax.Array, w: jax.Array, vth: float = 0.5,
                 out_dtype=jnp.float32) -> jax.Array:
    """PLIFNode forward. x: (B, T, *feature_dims) float. Returns spikes.

    out_dtype=jnp.float32 matches the PyTorch module exactly; pass
    jnp.bfloat16 (or jnp.int8) to cut spike write traffic -- exact since
    spikes are {0, 1}.
    """
    orig_shape = x.shape
    B, T = x.shape[0], x.shape[1]
    M = math.prod(x.shape[2:])
    x = x.astype(jnp.float32)

    # Flatten features; pad ONCE to a multiple of 128 so every per-timestep
    # store is lane-dense (masked vst every step would be far more expensive).
    M_pad = ((M + 127) // 128) * 128
    x3 = x.reshape(B, T, M)
    if M_pad != M:
        x3 = jnp.pad(x3, ((0, 0), (0, 0), (0, M_pad - M)))

    num_tc, block_budget, vmem_limit = _tpu_config()
    out_itemsize = jnp.dtype(out_dtype).itemsize
    R, L, r_tile, t_chunk, unroll = _pick_tiling(
        B, T, M_pad, out_itemsize=out_itemsize, num_tensorcores=num_tc,
        block_budget_bytes=block_budget)

    # Free (layout-preserving) reshape: no transposes, no extra HBM passes.
    x4 = x3.reshape(B, T, R, L)
    tau = jax.nn.sigmoid(w).astype(jnp.float32).reshape(1, 1)

    kernel = _plif_kernel(float(vth), out_dtype, unroll)
    spike4 = pl.pallas_call(
        kernel,
        out_shape=jax.ShapeDtypeStruct((B, T, R, L), out_dtype),
        grid=(B, R // r_tile, T // t_chunk),
        in_specs=[
            pl.BlockSpec(memory_space=pltpu.MemorySpace.SMEM),         # tau scalar
            pl.BlockSpec((1, t_chunk, r_tile, L),
                         lambda b, r, tc: (b, tc, r, 0)),              # x tile
        ],
        out_specs=pl.BlockSpec((1, t_chunk, r_tile, L),
                               lambda b, r, tc: (b, tc, r, 0)),
        scratch_shapes=[pltpu.VMEM((r_tile, L), jnp.float32)],         # mem carry
        compiler_params=pltpu.CompilerParams(
            dimension_semantics=("parallel", "parallel", "arbitrary"),
            vmem_limit_bytes=vmem_limit),
        cost_estimate=pl.CostEstimate(
            flops=4 * B * T * M_pad,
            transcendentals=0,
            bytes_accessed=(4 + out_itemsize) * B * T * M_pad),
    )(tau, x4)

    spike3 = spike4.reshape(B, T, M_pad)
    if M_pad != M:
        spike3 = spike3[:, :, :M]
    return spike3.reshape(orig_shape)


def plif_forward_ref(x, w, vth=0.5):
    """Pure-JAX reference (lax.scan over time), for correctness check."""
    tau = jax.nn.sigmoid(w)
    x_tm = jnp.moveaxis(x, 1, 0).astype(jnp.float32)

    def step(mem, xt):
        mem = tau * mem + xt
        spk = (mem > vth).astype(jnp.float32)
        return mem * (1.0 - spk), spk

    _, spikes = lax.scan(step, jnp.zeros_like(x_tm[0]), x_tm)
    return jnp.moveaxis(spikes, 0, 1)


if __name__ == "__main__":
    # Deterministic parameter init matching PLIFNode.__init__(init_a=2.0, Vth=0.5):
    init_a = 2.0
    vth = 0.5
    init_w = -math.log(init_a - 1.0)          # = 0.0 -> sigmoid(w) = 0.5
    w = jnp.float32(init_w)

    # Small deterministic input: (B, T, C, H, W)
    key = jax.random.PRNGKey(0)
    B, T, C, H, W = 2, 8, 4, 16, 16
    x = jax.random.normal(key, (B, T, C, H, W), dtype=jnp.float32)

    spike_ref = jax.block_until_ready(plif_forward_ref(x, w, vth=vth))

    # Default path: float32 spikes (exactly the PyTorch module's output dtype).
    spike = jax.block_until_ready(plif_forward(x, w, vth=vth))
    assert spike.shape == x.shape
    assert spike.dtype == jnp.float32
    assert jnp.allclose(spike, spike_ref, atol=1e-6), "f32 mismatch vs reference"

    # Bandwidth-optimized path: bf16 spikes (exact, since spikes are {0, 1});
    # halves the output HBM write traffic of this mem-bound kernel.
    spike_bf16 = jax.block_until_ready(
        plif_forward(x, w, vth=vth, out_dtype=jnp.bfloat16))
    assert spike_bf16.dtype == jnp.bfloat16
    assert jnp.array_equal(spike_bf16.astype(jnp.float32), spike_ref), \
        "bf16 mismatch vs reference"

    # TODO(synk): backward surrogate gradients (Learnable_ActFun1/2.backward)
    # and the host-side `param` dict mutation are not part of this forward kernel.
    print("KERNEL_OK")
</pallas_src>

<mosaic_0001>
module attributes {stable_mosaic.version = 11 : i64} {
  func.func @kernel(%arg0: i32, %arg1: i32, %arg2: i32, %arg3: memref<1x1xf32, #tpu.memory_space<smem>>, %arg4: memref<1x8x8x128xf32, #tpu.memory_space<vmem>>, %arg5: memref<1x8x8x128xf32, #tpu.memory_space<vmem>>, %arg6: memref<8x128xf32, #tpu.memory_space<vmem>>) attributes {dimension_semantics = [#tpu.dimension_semantics<parallel>, #tpu.dimension_semantics<parallel>, #tpu.dimension_semantics<arbitrary>], iteration_bounds = array<i64: 2, 1, 1>, scalar_prefetch = 0 : i64, scratch_operands = 1 : i64, tpu.core_type = #tpu.core_type<tc>, window_params = [{transform_indices = @transform_0, window_bounds = array<i64: 1, 1>}, {transform_indices = @transform_1, window_bounds = array<i64: 1, 8, 8, 128>}, {transform_indices = @transform_2, window_bounds = array<i64: 1, 8, 8, 128>}]} {
    %c0_i32 = arith.constant 0 : i32
    %0 = arith.cmpi eq, %arg2, %c0_i32 : i32
    %1 = arith.extui %0 : i1 to i32
    %c0_i32_0 = arith.constant 0 : i32
    %2 = arith.cmpi ne, %1, %c0_i32_0 : i32
    scf.if %2 {
      %cst_70 = arith.constant 0.000000e+00 : f32
      %134 = vector.broadcast %cst_70 : f32 to vector<8x128xf32>
      %c0_71 = arith.constant 0 : index
      %c0_72 = arith.constant 0 : index
      %135 = vector.load %arg6[%c0_71, %c0_72] : memref<8x128xf32, #tpu.memory_space<vmem>>, vector<8x128xf32>
      tpu.vector_store %arg6[%c0_71, %c0_72], %134 {strides = array<i32>} : memref<8x128xf32, #tpu.memory_space<vmem>>, vector<8x128xf32>,
    } else {
    }
    %c0 = arith.constant 0 : index
    %c0_1 = arith.constant 0 : index
    %3 = memref.load %arg3[%c0, %c0_1] : memref<1x1xf32, #tpu.memory_space<smem>>
    %c0_2 = arith.constant 0 : index
    %c0_3 = arith.constant 0 : index
    %4 = vector.load %arg6[%c0_2, %c0_3] : memref<8x128xf32, #tpu.memory_space<vmem>>, vector<8x128xf32>
    %c0_i32_4 = arith.constant 0 : i32
    %5 = vector.broadcast %3 : f32 to vector<8x128xf32>
    %6 = arith.mulf %5, %4 : vector<8x128xf32>
    %c0_5 = arith.constant 0 : index
    %7 = arith.index_cast %c0_i32_4 : i32 to index
    %c0_6 = arith.constant 0 : index
    %c0_7 = arith.constant 0 : index
    %8 = vector.load %arg4[%c0_5, %7, %c0_6, %c0_7] : memref<1x8x8x128xf32, #tpu.memory_space<vmem>>, vector<1x1x8x128xf32>
    %9 = vector.shape_cast %8 : vector<1x1x8x128xf32> to vector<8x128xf32>
    %10 = arith.addf %6, %9 : vector<8x128xf32>
    %cst = arith.constant 5.000000e-01 : f32
    %11 = vector.broadcast %cst : f32 to vector<8x128xf32>
    %12 = arith.cmpf ogt, %10, %11 : vector<8x128xf32>
    %13 = arith.extui %12 : vector<8x128xi1> to vector<8x128xi32>
    %14 = arith.sitofp %13 : vector<8x128xi32> to vector<8x128xf32>
    %c0_8 = arith.constant 0 : index
    %15 = arith.index_cast %c0_i32_4 : i32 to index
    %c0_9 = arith.constant 0 : index
    %c0_10 = arith.constant 0 : index
    %16 = vector.load %arg5[%c0_8, %15, %c0_9, %c0_10] : memref<1x8x8x128xf32, #tpu.memory_space<vmem>>, vector<1x1x8x128xf32>
    %17 = vector.shape_cast %16 : vector<1x1x8x128xf32> to vector<8x128xf32>
    %18 = vector.shape_cast %14 : vector<8x128xf32> to vector<1x1x8x128xf32>
    tpu.vector_store %arg5[%c0_8, %15, %c0_9, %c0_10], %18 {strides = array<i32>} : memref<1x8x8x128xf32, #tpu.memory_space<vmem>>, vector<1x1x8x128xf32>,
    %cst_11 = arith.constant 0.000000e+00 : f32
    %19 = vector.broadcast %cst_11 : f32 to vector<8x128xf32>
    %20 = arith.select %12, %19, %10 : vector<8x128xi1>, vector<8x128xf32>
    %c1_i32 = arith.constant 1 : i32
    %21 = vector.broadcast %3 : f32 to vector<8x128xf32>
    %22 = arith.mulf %21, %20 : vector<8x128xf32>
    %c0_12 = arith.constant 0 : index
    %23 = arith.index_cast %c1_i32 : i32 to index
    %c0_13 = arith.constant 0 : index
    %c0_14 = arith.constant 0 : index
    %24 = vector.load %arg4[%c0_12, %23, %c0_13, %c0_14] : memref<1x8x8x128xf32, #tpu.memory_space<vmem>>, vector<1x1x8x128xf32>
    %25 = vector.shape_cast %24 : vector<1x1x8x128xf32> to vector<8x128xf32>
    %26 = arith.addf %22, %25 : vector<8x128xf32>
    %cst_15 = arith.constant 5.000000e-01 : f32
    %27 = vector.broadcast %cst_15 : f32 to vector<8x128xf32>
    %28 = arith.cmpf ogt, %26, %27 : vector<8x128xf32>
    %29 = arith.extui %28 : vector<8x128xi1> to vector<8x128xi32>
    %30 = arith.sitofp %29 : vector<8x128xi32> to vector<8x128xf32>
    %c0_16 = arith.constant 0 : index
    %31 = arith.index_cast %c1_i32 : i32 to index
    %c0_17 = arith.constant 0 : index
    %c0_18 = arith.constant 0 : index
    %32 = vector.load %arg5[%c0_16, %31, %c0_17, %c0_18] : memref<1x8x8x128xf32, #tpu.memory_space<vmem>>, vector<1x1x8x128xf32>
    %33 = vector.shape_cast %32 : vector<1x1x8x128xf32> to vector<8x128xf32>
    %34 = vector.shape_cast %30 : vector<8x128xf32> to vector<1x1x8x128xf32>
    tpu.vector_store %arg5[%c0_16, %31, %c0_17, %c0_18], %34 {strides = array<i32>} : memref<1x8x8x128xf32, #tpu.memory_space<vmem>>, vector<1x1x8x128xf32>,
    %cst_19 = arith.constant 0.000000e+00 : f32
    %35 = vector.broadcast %cst_19 : f32 to vector<8x128xf32>
    %36 = arith.select %28, %35, %26 : vector<8x128xi1>, vector<8x128xf32>
    %c2_i32 = arith.constant 2 : i32
    %37 = vector.broadcast %3 : f32 to vector<8x128xf32>
    %38 = arith.mulf %37, %36 : vector<8x128xf32>
    %c0_20 = arith.constant 0 : index
    %39 = arith.index_cast %c2_i32 : i32 to index
    %c0_21 = arith.constant 0 : index
    %c0_22 = arith.constant 0 : index
    %40 = vector.load %arg4[%c0_20, %39, %c0_21, %c0_22] : memref<1x8x8x128xf32, #tpu.memory_space<vmem>>, vector<1x1x8x128xf32>
    %41 = vector.shape_cast %40 : vector<1x1x8x128xf32> to vector<8x128xf32>
    %42 = arith.addf %38, %41 : vector<8x128xf32>
    %cst_23 = arith.constant 5.000000e-01 : f32
    %43 = vector.broadcast %cst_23 : f32 to vector<8x128xf32>
    %44 = arith.cmpf ogt, %42, %43 : vector<8x128xf32>
    %45 = arith.extui %44 : vector<8x128xi1> to vector<8x128xi32>
    %46 = arith.sitofp %45 : vector<8x128xi32> to vector<8x128xf32>
    %c0_24 = arith.constant 0 : index
    %47 = arith.index_cast %c2_i32 : i32 to index
    %c0_25 = arith.constant 0 : index
    %c0_26 = arith.constant 0 : index
    %48 = vector.load %arg5[%c0_24, %47, %c0_25, %c0_26] : memref<1x8x8x128xf32, #tpu.memory_space<vmem>>, vector<1x1x8x128xf32>
    %49 = vector.shape_cast %48 : vector<1x1x8x128xf32> to vector<8x128xf32>
    %50 = vector.shape_cast %46 : vector<8x128xf32> to vector<1x1x8x128xf32>
    tpu.vector_store %arg5[%c0_24, %47, %c0_25, %c0_26], %50 {strides = array<i32>} : memref<1x8x8x128xf32, #tpu.memory_space<vmem>>, vector<1x1x8x128xf32>,
    %cst_27 = arith.constant 0.000000e+00 : f32
    %51 = vector.broadcast %cst_27 : f32 to vector<8x128xf32>
    %52 = arith.select %44, %51, %42 : vector<8x128xi1>, vector<8x128xf32>
    %c3_i32 = arith.constant 3 : i32
    %53 = vector.broadcast %3 : f32 to vector<8x128xf32>
    %54 = arith.mulf %53, %52 : vector<8x128xf32>
    %c0_28 = arith.constant 0 : index
    %55 = arith.index_cast %c3_i32 : i32 to index
    %c0_29 = arith.constant 0 : index
    %c0_30 = arith.constant 0 : index
    %56 = vector.load %arg4[%c0_28, %55, %c0_29, %c0_30] : memref<1x8x8x128xf32, #tpu.memory_space<vmem>>, vector<1x1x8x128xf32>
    %57 = vector.shape_cast %56 : vector<1x1x8x128xf32> to vector<8x128xf32>
    %58 = arith.addf %54, %57 : vector<8x128xf32>
    %cst_31 = arith.constant 5.000000e-01 : f32
    %59 = vector.broadcast %cst_31 : f32 to vector<8x128xf32>
    %60 = arith.cmpf ogt, %58, %59 : vector<8x128xf32>
    %61 = arith.extui %60 : vector<8x128xi1> to vector<8x128xi32>
    %62 = arith.sitofp %61 : vector<8x128xi32> to vector<8x128xf32>
    %c0_32 = arith.constant 0 : index
    %63 = arith.index_cast %c3_i32 : i32 to index
    %c0_33 = arith.constant 0 : index
    %c0_34 = arith.constant 0 : index
    %64 = vector.load %arg5[%c0_32, %63, %c0_33, %c0_34] : memref<1x8x8x128xf32, #tpu.memory_space<vmem>>, vector<1x1x8x128xf32>
    %65 = vector.shape_cast %64 : vector<1x1x8x128xf32> to vector<8x128xf32>
    %66 = vector.shape_cast %62 : vector<8x128xf32> to vector<1x1x8x128xf32>
    tpu.vector_store %arg5[%c0_32, %63, %c0_33, %c0_34], %66 {strides = array<i32>} : memref<1x8x8x128xf32, #tpu.memory_space<vmem>>, vector<1x1x8x128xf32>,
    %cst_35 = arith.constant 0.000000e+00 : f32
    %67 = vector.broadcast %cst_35 : f32 to vector<8x128xf32>
    %68 = arith.select %60, %67, %58 : vector<8x128xi1>, vector<8x128xf32>
    %c4_i32 = arith.constant 4 : i32
    %69 = vector.broadcast %3 : f32 to vector<8x128xf32>
    %70 = arith.mulf %69, %68 : vector<8x128xf32>
    %c0_36 = arith.constant 0 : index
    %71 = arith.index_cast %c4_i32 : i32 to index
    %c0_37 = arith.constant 0 : index
    %c0_38 = arith.constant 0 : index
    %72 = vector.load %arg4[%c0_36, %71, %c0_37, %c0_38] : memref<1x8x8x128xf32, #tpu.memory_space<vmem>>, vector<1x1x8x128xf32>
    %73 = vector.shape_cast %72 : vector<1x1x8x128xf32> to vector<8x128xf32>
    %74 = arith.addf %70, %73 : vector<8x128xf32>
    %cst_39 = arith.constant 5.000000e-01 : f32
    %75 = vector.broadcast %cst_39 : f32 to vector<8x128xf32>
    %76 = arith.cmpf ogt, %74, %75 : vector<8x128xf32>
    %77 = arith.extui %76 : vector<8x128xi1> to vector<8x128xi32>
    %78 = arith.sitofp %77 : vector<8x128xi32> to vector<8x128xf32>
    %c0_40 = arith.constant 0 : index
    %79 = arith.index_cast %c4_i32 : i32 to index
    %c0_41 = arith.constant 0 : index
    %c0_42 = arith.constant 0 : index
    %80 = vector.load %arg5[%c0_40, %79, %c0_41, %c0_42] : memref<1x8x8x128xf32, #tpu.memory_space<vmem>>, vector<1x1x8x128xf32>
    %81 = vector.shape_cast %80 : vector<1x1x8x128xf32> to vector<8x128xf32>
    %82 = vector.shape_cast %78 : vector<8x128xf32> to vector<1x1x8x128xf32>
    tpu.vector_store %arg5[%c0_40, %79, %c0_41, %c0_42], %82 {strides = array<i32>} : memref<1x8x8x128xf32, #tpu.memory_space<vmem>>, vector<1x1x8x128xf32>,
    %cst_43 = arith.constant 0.000000e+00 : f32
    %83 = vector.broadcast %cst_43 : f32 to vector<8x128xf32>
    %84 = arith.select %76, %83, %74 : vector<8x128xi1>, vector<8x128xf32>
    %c5_i32 = arith.constant 5 : i32
    %85 = vector.broadcast %3 : f32 to vector<8x128xf32>
    %86 = arith.mulf %85, %84 : vector<8x128xf32>
    %c0_44 = arith.constant 0 : index
    %87 = arith.index_cast %c5_i32 : i32 to index
    %c0_45 = arith.constant 0 : index
    %c0_46 = arith.constant 0 : index
    %88 = vector.load %arg4[%c0_44, %87, %c0_45, %c0_46] : memref<1x8x8x128xf32, #tpu.memory_space<vmem>>, vector<1x1x8x128xf32>
    %89 = vector.shape_cast %88 : vector<1x1x8x128xf32> to vector<8x128xf32>
    %90 = arith.addf %86, %89 : vector<8x128xf32>
    %cst_47 = arith.constant 5.000000e-01 : f32
    %91 = vector.broadcast %cst_47 : f32 to vector<8x128xf32>
    %92 = arith.cmpf ogt, %90, %91 : vector<8x128xf32>
    %93 = arith.extui %92 : vector<8x128xi1> to vector<8x128xi32>
    %94 = arith.sitofp %93 : vector<8x128xi32> to vector<8x128xf32>
    %c0_48 = arith.constant 0 : index
    %95 = arith.index_cast %c5_i32 : i32 to index
    %c0_49 = arith.constant 0 : index
    %c0_50 = arith.constant 0 : index
    %96 = vector.load %arg5[%c0_48, %95, %c0_49, %c0_50] : memref<1x8x8x128xf32, #tpu.memory_space<vmem>>, vector<1x1x8x128xf32>
    %97 = vector.shape_cast %96 : vector<1x1x8x128xf32> to vector<8x128xf32>
    %98 = vector.shape_cast %94 : vector<8x128xf32> to vector<1x1x8x128xf32>
    tpu.vector_store %arg5[%c0_48, %95, %c0_49, %c0_50], %98 {strides = array<i32>} : memref<1x8x8x128xf32, #tpu.memory_space<vmem>>, vector<1x1x8x128xf32>,
    %cst_51 = arith.constant 0.000000e+00 : f32
    %99 = vector.broadcast %cst_51 : f32 to vector<8x128xf32>
    %100 = arith.select %92, %99, %90 : vector<8x128xi1>, vector<8x128xf32>
    %c6_i32 = arith.constant 6 : i32
    %101 = vector.broadcast %3 : f32 to vector<8x128xf32>
    %102 = arith.mulf %101, %100 : vector<8x128xf32>
    %c0_52 = arith.constant 0 : index
    %103 = arith.index_cast %c6_i32 : i32 to index
    %c0_53 = arith.constant 0 : index
    %c0_54 = arith.constant 0 : index
    %104 = vector.load %arg4[%c0_52, %103, %c0_53, %c0_54] : memref<1x8x8x128xf32, #tpu.memory_space<vmem>>, vector<1x1x8x128xf32>
    %105 = vector.shape_cast %104 : vector<1x1x8x128xf32> to vector<8x128xf32>
    %106 = arith.addf %102, %105 : vector<8x128xf32>
    %cst_55 = arith.constant 5.000000e-01 : f32
    %107 = vector.broadcast %cst_55 : f32 to vector<8x128xf32>
    %108 = arith.cmpf ogt, %106, %107 : vector<8x128xf32>
    %109 = arith.extui %108 : vector<8x128xi1> to vector<8x128xi32>
    %110 = arith.sitofp %109 : vector<8x128xi32> to vector<8x128xf32>
    %c0_56 = arith.constant 0 : index
    %111 = arith.index_cast %c6_i32 : i32 to index
    %c0_57 = arith.constant 0 : index
    %c0_58 = arith.constant 0 : index
    %112 = vector.load %arg5[%c0_56, %111, %c0_57, %c0_58] : memref<1x8x8x128xf32, #tpu.memory_space<vmem>>, vector<1x1x8x128xf32>
    %113 = vector.shape_cast %112 : vector<1x1x8x128xf32> to vector<8x128xf32>
    %114 = vector.shape_cast %110 : vector<8x128xf32> to vector<1x1x8x128xf32>
    tpu.vector_store %arg5[%c0_56, %111, %c0_57, %c0_58], %114 {strides = array<i32>} : memref<1x8x8x128xf32, #tpu.memory_space<vmem>>, vector<1x1x8x128xf32>,
    %cst_59 = arith.constant 0.000000e+00 : f32
    %115 = vector.broadcast %cst_59 : f32 to vector<8x128xf32>
    %116 = arith.select %108, %115, %106 : vector<8x128xi1>, vector<8x128xf32>
    %c7_i32 = arith.constant 7 : i32
    %117 = vector.broadcast %3 : f32 to vector<8x128xf32>
    %118 = arith.mulf %117, %116 : vector<8x128xf32>
    %c0_60 = arith.constant 0 : index
    %119 = arith.index_cast %c7_i32 : i32 to index
    %c0_61 = arith.constant 0 : index
    %c0_62 = arith.constant 0 : index
    %120 = vector.load %arg4[%c0_60, %119, %c0_61, %c0_62] : memref<1x8x8x128xf32, #tpu.memory_space<vmem>>, vector<1x1x8x128xf32>
    %121 = vector.shape_cast %120 : vector<1x1x8x128xf32> to vector<8x128xf32>
    %122 = arith.addf %118, %121 : vector<8x128xf32>
    %cst_63 = arith.constant 5.000000e-01 : f32
    %123 = vector.broadcast %cst_63 : f32 to vector<8x128xf32>
    %124 = arith.cmpf ogt, %122, %123 : vector<8x128xf32>
    %125 = arith.extui %124 : vector<8x128xi1> to vector<8x128xi32>
    %126 = arith.sitofp %125 : vector<8x128xi32> to vector<8x128xf32>
    %c0_64 = arith.constant 0 : index
    %127 = arith.index_cast %c7_i32 : i32 to index
    %c0_65 = arith.constant 0 : index
    %c0_66 = arith.constant 0 : index
    %128 = vector.load %arg5[%c0_64, %127, %c0_65, %c0_66] : memref<1x8x8x128xf32, #tpu.memory_space<vmem>>, vector<1x1x8x128xf32>
    %129 = vector.shape_cast %128 : vector<1x1x8x128xf32> to vector<8x128xf32>
    %130 = vector.shape_cast %126 : vector<8x128xf32> to vector<1x1x8x128xf32>
    tpu.vector_store %arg5[%c0_64, %127, %c0_65, %c0_66], %130 {strides = array<i32>} : memref<1x8x8x128xf32, #tpu.memory_space<vmem>>, vector<1x1x8x128xf32>,
    %cst_67 = arith.constant 0.000000e+00 : f32
    %131 = vector.broadcast %cst_67 : f32 to vector<8x128xf32>
    %132 = arith.select %124, %131, %122 : vector<8x128xi1>, vector<8x128xf32>
    %c8_i32 = arith.constant 8 : i32
    %c0_68 = arith.constant 0 : index
    %c0_69 = arith.constant 0 : index
    %133 = vector.load %arg6[%c0_68, %c0_69] : memref<8x128xf32, #tpu.memory_space<vmem>>, vector<8x128xf32>
    tpu.vector_store %arg6[%c0_68, %c0_69], %132 {strides = array<i32>} : memref<8x128xf32, #tpu.memory_space<vmem>>, vector<8x128xf32>,
    return
  }
  func.func @transform_0(%arg0: i32, %arg1: i32, %arg2: i32) -> (i32, i32) {
    %c0_i32 = arith.constant 0 : i32
    %c0_i32_0 = arith.constant 0 : i32
    %c0_i32_1 = arith.constant 0 : i32
    return %c0_i32, %c0_i32_0 : i32, i32
  }
  func.func @transform_1(%arg0: i32, %arg1: i32, %arg2: i32) -> (i32, i32, i32, i32) {
    %c0_i32 = arith.constant 0 : i32
    %c0_i32_0 = arith.constant 0 : i32
    return %arg0, %arg2, %arg1, %c0_i32 : i32, i32, i32, i32
  }
  func.func @transform_2(%arg0: i32, %arg1: i32, %arg2: i32) -> (i32, i32, i32, i32) {
    %c0_i32 = arith.constant 0 : i32
    %c0_i32_0 = arith.constant 0 : i32
    return %arg0, %arg2, %arg1, %c0_i32 : i32, i32, i32, i32
  }
}

</mosaic_0001>

<llo_original>
// kernel: tpu_custom_call.1
$region0: #{tpu_custom_call.1}
  #allocation0 [shape = 'u32[]', space=smem, size = 0x4, offset = 0x4, fixed_abs, tag = 'smem constant byte address 0x4 - core index']
  #allocation1 [shape = 'u32[144,128]{1,0:T(1,128)}', space=vmem, size = 0x12000, scoped, tag = 'internal scratch']
  #allocation2 [shape = 'f32[8,128]{1,0:T(8,128)}', space=vmem, size = 0x1000, scoped, tag = 'scratch operand']
  #allocation3 [shape = 'f32[1,1]{1,0:T(1,128)S(6)}', space=smem, size = 0x200, scoped, tag = 'scoped memory for tpu_custom_call.1']
  %s0 = inlined_call_operand.<no memory space> [shape: f32[1,1], index: 0, kind: input, shape index: {}]
  %s1 = inlined_call_operand.hbm [shape: f32[2,8,8,128], index: 1, kind: input, shape index: {}]
  %s2 = inlined_call_operand.hbm [shape: f32[2,8,8,128], index: 2, kind: output, shape index: {}]
  %s3 = sld [smem:[#allocation0]]
  $region49: #{tpu_custom_call.1} parent=0
    _
  %s5 = ssub.s32 1, %s3
  %s6 = scalar_select 0, %s5, %s3
  %7 = sst [smem:[#allocation3]] %s0
  $region1: #{tpu_custom_call.1} parent=0
    #allocation4 [shape = 'u8[65536]{0}', space=vmem, size = 0x10000, scoped, tag = 'input window, operand 1']
    #allocation5 [shape = 's32[2]{0}', space=sflag, size = 0x8, scoped, tag = 'scoped memory for tpu_custom_call.1']
    #allocation6 [shape = 's32[2]{0}', space=sflag, size = 0x8, scoped, tag = 'scoped memory for tpu_custom_call.1']
    #allocation7 [shape = 'u8[65536]{0}', space=vmem, size = 0x10000, scoped, tag = 'output window, operand 0']
    %8 = vsyncpa [#allocation5], 0
    %s9 = scalar_lea.sflag [#allocation5], 1
    %10 = vsyncpa %s9, 0
    %11 = vsyncpa [#allocation6], 0
    %s12 = scalar_lea.sflag [#allocation6], 1
    %13 = vsyncpa %s12, 0
    loop: start=0, step=1, limit=4
    $region2: #{tpu_custom_call.1} parent=1 // loop_pre_header
      _
    $region3: #{tpu_custom_call.1} parent=1 // loop_header
      %s15 = sphi 0, %s19
      %p16 = scmp.ge.s32.totalorder %s15, 4
      %s22 = sphi 0, %s41
      %s23 = sphi 0, %s37
      %s24 = sphi 0, %s33
      %s25 = sphi 0, %s22
      %s26 = sphi 0, %s23
      %s27 = sphi 0, %s24
      %s28 = sphi 0, %s25
      %s29 = sphi 0, %s26
      %s30 = sphi 0, %s27
      %s42 = sphi 0, %s42
      %s44 = sphi 0, %s42
      %s45 = sphi 0, %s44
      %s59 = sphi 0, %s45
      %s69 = sphi 0, %s71
      %s72 = sphi 0, %s69
      %s73 = sphi 0, %s72
      %s89 = sphi 0, %s73
      %s99 = sphi 0, %s101
      %s102 = sphi 0, %s99
      %s103 = sphi 0, %s102
      %s119 = sphi 0, %s103
    $region4: #{tpu_custom_call.1} parent=1 // loop_header_branch
      %18 = sbr.rel (%p16) target = $region8
    $region5: #{tpu_custom_call.1} parent=1 // loop_body
      %s20 = ssub.s32 %s15, 1
      %s21 = ssub.s32 %s15, 2
      %s31 = sadd.s32 1, %s24
      %p32 = scmp.ge.s32.totalorder %s31, 1
      %s33 = scalar_select %p32, 0, %s31
      %s34 = sadd.s32 1, %s23
      %s35 = scalar_select %p32, %s34, %s23
      %p36 = scmp.ge.s32.totalorder %s35, 1
      %s37 = scalar_select %p36, 0, %s35
      %s38 = sadd.s32 1, %s22
      %s39 = scalar_select %p36, %s38, %s22
      %p40 = scmp.ge.s32.totalorder %s39, 2
      %s41 = scalar_select %p40, 0, %s39
      %s43 = sadd.s32 %s42, 1
      %p46 = scmp.eq.s32.totalorder %s15, 1
      %p47 = scmp.ne.s32.totalorder %s42, %s44
      %p48 = scmp.eq.s32.totalorder %s15, 0
      %p49 = por %p47, %p48
      %p50 = scmp.ne.s32.totalorder %s42, %s44
      %p51 = scmp.eq.s32.totalorder %s20, 1
      %p52 = por %p50, %p51
      %p53 = scmp.ne.s32.totalorder %s44, %s45
      %p54 = scmp.eq.s32.totalorder %s20, 0
      %p55 = por %p53, %p54
      %p56 = scmp.ne.s32.totalorder %s44, %s45
      %p57 = scmp.eq.s32.totalorder %s21, 1
      %p58 = por %p56, %p57
      %p60 = scmp.ne.s32.totalorder %s45, %s59
      %p61 = scmp.eq.s32.totalorder %s21, 0
      %p62 = por %p60, %p61
      %s63 = ssub.s32 %s22, %s41
      %s64 = ssub.s32 %s24, %s33
      %s65 = sor.u32 %s63, %s64
      %s66 = ssub.s32 %s23, %s37
      %s67 = sor.u32 %s65, %s66
      %p68 = scmp.eq.s32.totalorder %s67, 0
      %s70 = sadd.s32 %s69, 1
      %s71 = scalar_select %p68, %s69, %s70
      %p74 = pneg %p68
      %p75 = scmp.eq.s32.totalorder %s15, 1
      %p76 = por %p74, %p75
      %p77 = scmp.ne.s32.totalorder %s69, %s72
      %p78 = scmp.eq.s32.totalorder %s15, 0
      %p79 = por %p77, %p78
      %p80 = scmp.ne.s32.totalorder %s69, %s72
      %p81 = scmp.eq.s32.totalorder %s20, 1
      %p82 = por %p80, %p81
      %p83 = scmp.ne.s32.totalorder %s72, %s73
      %p84 = scmp.eq.s32.totalorder %s20, 0
      %p85 = por %p83, %p84
      %p86 = scmp.ne.s32.totalorder %s72, %s73
      %p87 = scmp.eq.s32.totalorder %s21, 1
      %p88 = por %p86, %p87
      %p90 = scmp.ne.s32.totalorder %s73, %s89
      %p91 = scmp.eq.s32.totalorder %s21, 0
      %p92 = por %p90, %p91
      %s93 = ssub.s32 %s22, %s41
      %s94 = ssub.s32 %s24, %s33
      %s95 = sor.u32 %s93, %s94
      %s96 = ssub.s32 %s23, %s37
      %s97 = sor.u32 %s95, %s96
      %p98 = scmp.eq.s32.totalorder %s97, 0
      %s100 = sadd.s32 %s99, 1
      %s101 = scalar_select %p98, %s99, %s100
      %p104 = pneg %p98
      %p105 = scmp.eq.s32.totalorder %s15, 1
      %p106 = por %p104, %p105
      %p107 = scmp.ne.s32.totalorder %s99, %s102
      %p108 = scmp.eq.s32.totalorder %s15, 0
      %p109 = por %p107, %p108
      %p110 = scmp.ne.s32.totalorder %s99, %s102
      %p111 = scmp.eq.s32.totalorder %s20, 1
      %p112 = por %p110, %p111
      %p113 = scmp.ne.s32.totalorder %s102, %s103
      %p114 = scmp.eq.s32.totalorder %s20, 0
      %p115 = por %p113, %p114
      %p116 = scmp.ne.s32.totalorder %s102, %s103
      %p117 = scmp.eq.s32.totalorder %s21, 1
      %p118 = por %p116, %p117
      %p120 = scmp.ne.s32.totalorder %s103, %s119
      %p121 = scmp.eq.s32.totalorder %s21, 0
      %p122 = por %p120, %p121
      %p123 = scmp.le.s32.totalorder 1, %s15
      %p124 = scmp.lt.s32.totalorder %s15, 3
      %p125 = pnand %p123, %p124
      %p126 = pneg %p125
      // Predicated region
      $region9: #{tpu_custom_call.1} parent=5 // pred_check
        _
      $region10: #{tpu_custom_call.1} parent=5 // pred_check_branch
        %128 = sbr.rel (%p125) target = $region12
      $region11: #{tpu_custom_call.1} parent=5 // pred_region
        %s129 = ssub.s32 %s15, 1
        // Predicated region
        $region13: #{tpu_custom_call.1} parent=11 // pred_check
          %p130 = pneg %p55
        $region14: #{tpu_custom_call.1} parent=11 // pred_check_branch
          %132 = sbr.rel (%p130) target = $region16
        $region15: #{tpu_custom_call.1} parent=11 // pred_region
          _
        $region16: #{tpu_custom_call.1} parent=11 // pred_fallthru
          _
      $region12: #{tpu_custom_call.1} parent=5 // pred_fallthru
        _
      %p133 = scmp.lt.s32.totalorder %s15, 2
      // Predicated region
      $region17: #{tpu_custom_call.1} parent=5 // pred_check
        %p134 = pneg %p133
      $region18: #{tpu_custom_call.1} parent=5 // pred_check_branch
        %136 = sbr.rel (%p134) target = $region20
      $region19: #{tpu_custom_call.1} parent=5 // pred_region
        // Predicated region
        $region21: #{tpu_custom_call.1} parent=19 // pred_check
          %p137 = pneg %p79
        $region22: #{tpu_custom_call.1} parent=19 // pred_check_branch
          %139 = sbr.rel (%p137) target = $region24
        $region23: #{tpu_custom_call.1} parent=19 // pred_region
          %s140 = sand.u32 %s69, 1
          %s141 = scalar_lea.sflag [#allocation5], %s140
          %s142 = sand.u32 %s69, 1
          %s143 = smul.addr %s142, 64
          %s144 = scalar_lea.vmem [#allocation4], %s143
          %s145 = smul.u32 8, %s24
          %s147 = ssub.s32 1024, 1024
          %148 = vsyncadd %s141, %s147
          %s149 = sadd.s32 %s23, %s145
          %s150 = smul.addr %s22, 8
          %s151 = sadd.s32 %s149, %s150
          %s152 = smul.addr %s151, 128
          %s153 = scalar_lea.hbm %s1, %s152
          %s154 = sshll.u32 %s144, 4
          %s155 = int_to_ptr.vmem [resolvable:$true] %s154
          %160 = dma.hbm_to_vmem [thread:$0]  %s153, 1024, %s155, %s141, 128, 128, 8
        $region24: #{tpu_custom_call.1} parent=19 // pred_fallthru
          _
      $region20: #{tpu_custom_call.1} parent=5 // pred_fallthru
        _
      %p161 = scmp.le.s32.totalorder 1, %s15
      %p162 = scmp.lt.s32.totalorder %s15, 3
      %p163 = pnand %p161, %p162
      %p164 = pneg %p163
      // Predicated region
      $region25: #{tpu_custom_call.1} parent=5 // pred_check
        _
      $region26: #{tpu_custom_call.1} parent=5 // pred_check_branch
        %166 = sbr.rel (%p163) target = $region28
      $region27: #{tpu_custom_call.1} parent=5 // pred_region
        %s167 = ssub.s32 %s15, 1
        %s168 = sand.u32 %s72, 1
        %s169 = scalar_lea.sflag [#allocation5], %s168
        %s170 = sand.u32 %s72, 1
        %s171 = smul.addr %s170, 64
        %s172 = scalar_lea.vmem [#allocation4], %s171
        // Predicated region
        $region29: #{tpu_custom_call.1} parent=27 // pred_check
          %p173 = pneg %p85
        $region30: #{tpu_custom_call.1} parent=27 // pred_check_branch
          %175 = sbr.rel (%p173) target = $region32
        $region31: #{tpu_custom_call.1} parent=27 // pred_region
          %176 = dma.done %s169, 1024
        $region32: #{tpu_custom_call.1} parent=27 // pred_fallthru
          _
        %p177 = pneg %p55
        %p178 = pneg %p52
        %s179 = sand.u32 %s72, 1
        %s180 = scalar_lea.sflag [#allocation5], %s179
        %s181 = sand.u32 %s72, 1
        %s182 = smul.addr %s181, 64
        %s183 = scalar_lea.vmem [#allocation4], %s182
        %p184 = pneg %p85
        %p185 = pneg %p82
        %p186 = pneg %p115
        %p187 = pneg %p112
        %s188 = sand.u32 %s102, 1
        %s189 = scalar_lea.sflag [#allocation6], %s188
        %s190 = sand.u32 %s102, 1
        %s191 = smul.addr %s190, 64
        %s192 = scalar_lea.vmem [#allocation7], %s191
        %s193 = smul.u32 8, %s27
        %s194 = smul.u32 8, %s27
        %p195 = scmp.eq.s32.totalorder %s27, 0
        // Predicated region
        $region33: #{tpu_custom_call.1} parent=27 // pred_check
          %p196 = pneg %p195
        $region34: #{tpu_custom_call.1} parent=27 // pred_check_branch
          %198 = sbr.rel (%p196) target = $region36
        $region35: #{tpu_custom_call.1} parent=27 // pred_region
          %199 = vst [vmem:[#allocation2] sm:$0xff] 0.0
        $region36: #{tpu_custom_call.1} parent=27 // pred_fallthru
          _
        %s200 = sld [smem:[#allocation3]]
        %v201 = vld [vmem:[#allocation2] sm:$0xff]
        %v202 = vstv %s200
        %v203 = vmul.f32 %v202, %v201
        %v204 = vld [vmem:[%s172] sm:$0xff]
        %v205 = vadd.f32 %v203, %v204
        %vm206 = vcmp.gt.f32.partialorder %v205, 0.5
        %v207 = vsel %vm206, 1, 0
        %v208 = vcvt.s32.f32 %v207
        %209 = vst [vmem:[%s192] sm:$0xff] %v208
        %v210 = vsel %vm206, 0.0, %v205
        %v211 = vmul.f32 %v202, %v210
        %s212 = scalar_lea.vmem %s172, 8 [#allocation4]
        %v213 = vld [vmem:[%s212] sm:$0xff]
        %v214 = vadd.f32 %v211, %v213
        %vm215 = vcmp.gt.f32.partialorder %v214, 0.5
        %v216 = vsel %vm215, 1, 0
        %v217 = vcvt.s32.f32 %v216
        %s218 = scalar_lea.vmem %s192, 8 [#allocation7]
        %219 = vst [vmem:[%s218] sm:$0xff] %v217
        %v220 = vsel %vm215, 0.0, %v214
        %v221 = vmul.f32 %v202, %v220
        %s222 = scalar_lea.vmem %s172, 16 [#allocation4]
        %v223 = vld [vmem:[%s222] sm:$0xff]
        %v224 = vadd.f32 %v221, %v223
        %vm225 = vcmp.gt.f32.partialorder %v224, 0.5
        %v226 = vsel %vm225, 1, 0
        %v227 = vcvt.s32.f32 %v226
        %s228 = scalar_lea.vmem %s192, 16 [#allocation7]
        %229 = vst [vmem:[%s228] sm:$0xff] %v227
        %v230 = vsel %vm225, 0.0, %v224
        %v231 = vmul.f32 %v202, %v230
        %s232 = scalar_lea.vmem %s172, 24 [#allocation4]
        %v233 = vld [vmem:[%s232] sm:$0xff]
        %v234 = vadd.f32 %v231, %v233
        %vm235 = vcmp.gt.f32.partialorder %v234, 0.5
        %v236 = vsel %vm235, 1, 0
        %v237 = vcvt.s32.f32 %v236
        %s238 = scalar_lea.vmem %s192, 24 [#allocation7]
        %239 = vst [vmem:[%s238] sm:$0xff] %v237
        %v240 = vsel %vm235, 0.0, %v234
        %v241 = vmul.f32 %v202, %v240
        %s242 = scalar_lea.vmem %s172, 32 [#allocation4]
        %v243 = vld [vmem:[%s242] sm:$0xff]
        %v244 = vadd.f32 %v241, %v243
        %vm245 = vcmp.gt.f32.partialorder %v244, 0.5
        %v246 = vsel %vm245, 1, 0
        %v247 = vcvt.s32.f32 %v246
        %s248 = scalar_lea.vmem %s192, 32 [#allocation7]
        %249 = vst [vmem:[%s248] sm:$0xff] %v247
        %v250 = vsel %vm245, 0.0, %v244
        %v251 = vmul.f32 %v202, %v250
        %s252 = scalar_lea.vmem %s172, 40 [#allocation4]
        %v253 = vld [vmem:[%s252] sm:$0xff]
        %v254 = vadd.f32 %v251, %v253
        %vm255 = vcmp.gt.f32.partialorder %v254, 0.5
        %v256 = vsel %vm255, 1, 0
        %v257 = vcvt.s32.f32 %v256
        %s258 = scalar_lea.vmem %s192, 40 [#allocation7]
        %259 = vst [vmem:[%s258] sm:$0xff] %v257
        %v260 = vsel %vm255, 0.0, %v254
        %v261 = vmul.f32 %v202, %v260
        %s262 = scalar_lea.vmem %s172, 48 [#allocation4]
        %v263 = vld [vmem:[%s262] sm:$0xff]
        %v264 = vadd.f32 %v261, %v263
        %vm265 = vcmp.gt.f32.partialorder %v264, 0.5
        %v266 = vsel %vm265, 1, 0
        %v267 = vcvt.s32.f32 %v266
        %s268 = scalar_lea.vmem %s192, 48 [#allocation7]
        %269 = vst [vmem:[%s268] sm:$0xff] %v267
        %v270 = vsel %vm265, 0.0, %v264
        %v271 = vmul.f32 %v202, %v270
        %s272 = scalar_lea.vmem %s172, 56 [#allocation4]
        %v273 = vld [vmem:[%s272] sm:$0xff]
        %v274 = vadd.f32 %v271, %v273
        %vm275 = vcmp.gt.f32.partialorder %v274, 0.5
        %v276 = vsel %vm275, 1, 0
        %v277 = vcvt.s32.f32 %v276
        %s278 = scalar_lea.vmem %s192, 56 [#allocation7]
        %279 = vst [vmem:[%s278] sm:$0xff] %v277
        %v280 = vsel %vm275, 0.0, %v274
        %281 = vst [vmem:[#allocation2] sm:$0xff] %v280
        %s282 = sand.u32 %s102, 1
        %s283 = scalar_lea.sflag [#allocation6], %s282
        %s284 = sand.u32 %s102, 1
        %s285 = smul.addr %s284, 64
        %s286 = scalar_lea.vmem [#allocation7], %s285
        // Predicated region
        $region37: #{tpu_custom_call.1} parent=27 // pred_check
          %p287 = pneg %p112
        $region38: #{tpu_custom_call.1} parent=27 // pred_check_branch
          %289 = sbr.rel (%p287) target = $region40
        $region39: #{tpu_custom_call.1} parent=27 // pred_region
          %s290 = smul.u32 8, %s27
          %s292 = ssub.s32 1024, 1024
          %293 = vsyncadd %s283, %s292
          %s294 = sadd.s32 %s26, %s290
          %s295 = smul.addr %s25, 8
          %s296 = sadd.s32 %s294, %s295
          %s297 = smul.addr %s296, 128
          %s298 = scalar_lea.hbm %s2, %s297
          %s299 = sshll.u32 %s286, 4
          %s300 = int_to_ptr.vmem [resolvable:$true] %s299
          %305 = dma.vmem_to_hbm [thread:$0]  %s300, 1024, %s298, %s283, 128, 128, 8
        $region40: #{tpu_custom_call.1} parent=27 // pred_fallthru
          _
      $region28: #{tpu_custom_call.1} parent=5 // pred_fallthru
        _
      %p306 = scmp.le.s32.totalorder 2, %s15
      // Predicated region
      $region41: #{tpu_custom_call.1} parent=5 // pred_check
        %p307 = pneg %p306
      $region42: #{tpu_custom_call.1} parent=5 // pred_check_branch
        %309 = sbr.rel (%p307) target = $region44
      $region43: #{tpu_custom_call.1} parent=5 // pred_region
        %s310 = ssub.s32 %s15, 2
        // Predicated region
        $region45: #{tpu_custom_call.1} parent=43 // pred_check
          %p311 = pneg %p118
        $region46: #{tpu_custom_call.1} parent=43 // pred_check_branch
          %313 = sbr.rel (%p311) target = $region48
        $region47: #{tpu_custom_call.1} parent=43 // pred_region
          %s314 = sand.u32 %s103, 1
          %s315 = scalar_lea.sflag [#allocation6], %s314
          %s316 = sand.u32 %s103, 1
          %s317 = smul.addr %s316, 64
          %s318 = scalar_lea.vmem [#allocation7], %s317
          %319 = dma.done %s315, 1024
        $region48: #{tpu_custom_call.1} parent=43 // pred_fallthru
          _
      $region44: #{tpu_custom_call.1} parent=5 // pred_fallthru
        _
    $region6: #{tpu_custom_call.1} parent=1 // loop_footer
      %s19 = sadd.s32 1, %s15
    $region7: #{tpu_custom_call.1} parent=1 // loop_footer_branch
      %14 = sbr.rel target = $region3
    $region8: #{tpu_custom_call.1} parent=1 // loop_exit
      _
    %320 = vsyncpa [#allocation5], 1
    %s321 = scalar_lea.sflag [#allocation5], 1
    %322 = vsyncpa %s321, 1
    %323 = vsyncpa [#allocation6], 1
    %s324 = scalar_lea.sflag [#allocation6], 1
    %325 = vsyncpa %s324, 1

</llo_original>
